<compile_context>
chip_gen: v6e
topology: v6e:2x2x1
jax: 0.10.0
libtpu: 0.0.40
codegen_flags: <defaults>
</compile_context>

<pallas_src>
import functools

import jax
import jax.numpy as jnp
from jax.experimental import pallas as pl
from jax.experimental.pallas import tpu as pltpu


def _focal_weight(one_minus_pt, gamma):
    """(1 - p_t)**gamma, specialized at trace time for integer gamma."""
    g = float(gamma)
    if g == 0.0:
        return jnp.ones_like(one_minus_pt)
    if g == int(g) and 1.0 <= g <= 8.0:
        w = one_minus_pt
        for _ in range(int(g) - 1):          # gamma==2 -> one VPU multiply
            w = w * one_minus_pt
        return w
    # non-integer gamma: fall back to power (EUP)
    return jnp.power(one_minus_pt, jnp.float32(g))


def _focal_loss_kernel(logits_ref, targets_ref, *rest,
                       gamma, n_total, tile_n, has_alpha, needs_mask):
    if has_alpha:
        alpha_ref, out_ref = rest
    else:
        (out_ref,) = rest

    x = logits_ref[...].astype(jnp.float32)              # (TN, C) widen in-kernel
    t = targets_ref[...]                                  # (TN, 1) int32

    # --- numerically-stable log-softmax over the class (lane) axis ---
    m = jnp.max(x, axis=-1, keepdims=True)                # (TN, 1)
    shifted = x - m                                        # (TN, C)
    e = jnp.exp(shifted)                                   # (TN, C)  EUP
    s = jnp.sum(e, axis=-1, keepdims=True)                 # (TN, 1)
    logp = shifted - jnp.log(s)                            # (TN, C)
    p = e * (1.0 / s)                                       # (TN, C) softmax probs

    # focal term computed elementwise; only the target column survives masking,
    # so no per-row gather reductions are needed.
    w = _focal_weight(1.0 - p, gamma)                       # (TN, C)
    base = -(w * logp)                                      # (TN, C)
    if has_alpha:
        base = base * alpha_ref[...]                        # (1, C) broadcast

    # one-hot target mask (+ padded-row mask when N % tile_n != 0)
    col = jax.lax.broadcasted_iota(jnp.int32, base.shape, 1)
    mask = col == t                                         # (TN, C)
    if needs_mask:
        i = pl.program_id(0)
        row = jax.lax.broadcasted_iota(jnp.int32, (tile_n, 1), 0)
        valid = (i * tile_n + row) < n_total                # (TN, 1)
        mask = jnp.logical_and(mask, valid)
    loss_elem = jnp.where(mask, base, 0.0)                  # (TN, C)

    # Fold (TN, C) -> (8, C) with aligned static slices + a pairwise add tree
    # (pure VPU work; the single expensive cross-lane reduce happens once, in
    # JAX, over the tiny per-tile partials).
    blocks = [loss_elem[b * 8:(b + 1) * 8, :] for b in range(tile_n // 8)]
    while len(blocks) > 1:
        nxt = []
        for j in range(0, len(blocks) - 1, 2):
            nxt.append(blocks[j] + blocks[j + 1])
        if len(blocks) % 2:
            nxt.append(blocks[-1])
        blocks = nxt
    partial = blocks[0]                                     # (8, C)

    out_ref[0] = partial                                    # block (1, 8, C)


def _choose_tile_n(n, c, itemsize, vmem_budget_bytes=16 * 1024 * 1024):
    """Largest row tile (multiple of 8, <=1024) whose working set fits the budget.

    Rough per-row bytes: double-buffered native-dtype logits DMA tile plus a
    handful of f32 (tile_n, C) temporaries inside the kernel.
    """
    per_row = max(1, c * (2 * itemsize + 6 * 4) + 16)
    max_rows = max(8, vmem_budget_bytes // per_row)
    tile = min(1024, max_rows)
    tile = min(tile, ((n + 7) // 8) * 8)     # never bigger than N (rounded up)
    return max(8, (tile // 8) * 8)


def focal_loss(logits, targets, gamma=2.0, alpha=None, tile_n=None):
    """Pallas equivalent of FocalLoss(gamma, alpha)(logits, targets).

    logits: (N, C) float, targets: (N,) int, alpha: optional (C,) float.
    Returns a scalar float32 (mean focal loss).
    """
    n, c = logits.shape
    if tile_n is None:
        tile_n = _choose_tile_n(n, c, jnp.dtype(logits.dtype).itemsize)
    tile_n = max(8, (int(tile_n) // 8) * 8)

    num_tiles = pl.cdiv(n, tile_n)
    needs_mask = (num_tiles * tile_n) != n
    has_alpha = alpha is not None

    t2 = targets.astype(jnp.int32).reshape(n, 1)

    in_specs = [
        pl.BlockSpec((tile_n, c), lambda i: (i, 0)),   # logits tile (native dtype)
        pl.BlockSpec((tile_n, 1), lambda i: (i, 0)),   # targets tile
    ]
    args = [logits, t2]
    if has_alpha:
        alpha_arr = jnp.asarray(alpha, jnp.float32).reshape(1, c)
        # constant index_map -> stays VMEM-resident, no re-DMA per step
        in_specs.append(pl.BlockSpec((1, c), lambda i: (0, 0)))
        args.append(alpha_arr)

    partials = pl.pallas_call(
        functools.partial(_focal_loss_kernel, gamma=gamma, n_total=n,
                          tile_n=tile_n, has_alpha=has_alpha,
                          needs_mask=needs_mask),
        out_shape=jax.ShapeDtypeStruct((num_tiles, 8, c), jnp.float32),
        grid_spec=pltpu.PrefetchScalarGridSpec(
            num_scalar_prefetch=0,
            grid=(num_tiles,),
            in_specs=in_specs,
            out_specs=pl.BlockSpec((1, 8, c), lambda i: (i, 0, 0)),
        ),
        compiler_params=pltpu.CompilerParams(
            # Each step writes a disjoint output block -> safe to shard across
            # TensorCores (v7x megacore); no shared accumulator anymore.
            dimension_semantics=("parallel",),
            vmem_limit_bytes=32 * 1024 * 1024,
        ),
    )(*args)

    # Tiny finalize in JAX: single cross-lane reduce over (num_tiles, 8, C)
    # partials, then the mean over the TRUE sample count.
    return jnp.sum(partials) / jnp.float32(n)


def _reference_focal_loss(logits, targets, gamma=2.0, alpha=None):
    # pure-JAX mirror of the PyTorch forward, for verification
    logp = jax.nn.log_softmax(logits.astype(jnp.float32), axis=1)
    logpt = jnp.take_along_axis(logp, targets[:, None].astype(jnp.int32), axis=1)[:, 0]
    pt = jnp.exp(logpt)
    loss = -((1.0 - pt) ** gamma) * logpt
    if alpha is not None:
        loss = alpha[targets] * loss
    return jnp.mean(loss)


if __name__ == "__main__":
    key = jax.random.PRNGKey(0)
    k1, k2, k3, k4 = jax.random.split(key, 4)

    # Case 1: default FocalLoss() — gamma=2.0, alpha=None
    N, C = 64, 10
    logits = jax.random.normal(k1, (N, C), dtype=jnp.float32)
    targets = jax.random.randint(k2, (N,), 0, C, dtype=jnp.int32)

    out = jax.block_until_ready(focal_loss(logits, targets, gamma=2.0, alpha=None))
    ref = _reference_focal_loss(logits, targets, gamma=2.0, alpha=None)
    assert jnp.allclose(out, ref, rtol=1e-5, atol=1e-6), (out, ref)

    # Case 2: alpha weights + non-divisible N + multi-tile parallel grid
    N2, C2 = 50, 10
    logits2 = jax.random.normal(k3, (N2, C2), dtype=jnp.float32)
    targets2 = jax.random.randint(k4, (N2,), 0, C2, dtype=jnp.int32)
    alpha = jnp.linspace(0.5, 1.5, C2, dtype=jnp.float32)

    out2 = jax.block_until_ready(
        focal_loss(logits2, targets2, gamma=2.0, alpha=alpha, tile_n=16))
    ref2 = _reference_focal_loss(logits2, targets2, gamma=2.0, alpha=alpha)
    assert jnp.allclose(out2, ref2, rtol=1e-5, atol=1e-6), (out2, ref2)

    print("KERNEL_OK")
</pallas_src>

<mosaic_0001>
module attributes {stable_mosaic.version = 11 : i64} {
  func.func @_focal_loss_kernel(%arg0: i32, %arg1: memref<64x10xf32, #tpu.memory_space<vmem>>, %arg2: memref<64x1xi32, #tpu.memory_space<vmem>>, %arg3: memref<1x8x10xf32, #tpu.memory_space<vmem>>) attributes {dimension_semantics = [#tpu.dimension_semantics<parallel>], iteration_bounds = array<i64: 1>, scalar_prefetch = 0 : i64, scratch_operands = 0 : i64, tpu.core_type = #tpu.core_type<tc>, window_params = [{transform_indices = @transform_0, window_bounds = array<i64: 64, 10>}, {transform_indices = @transform_1, window_bounds = array<i64: 64, 1>}, {transform_indices = @transform_2, window_bounds = array<i64: 1, 8, 10>}]} {
    %c0 = arith.constant 0 : index
    %c0_0 = arith.constant 0 : index
    %0 = vector.load %arg1[%c0, %c0_0] : memref<64x10xf32, #tpu.memory_space<vmem>>, vector<64x10xf32>
    %c0_1 = arith.constant 0 : index
    %c0_2 = arith.constant 0 : index
    %1 = vector.load %arg2[%c0_1, %c0_2] : memref<64x1xi32, #tpu.memory_space<vmem>>, vector<64x1xi32>
    %cst = arith.constant dense<0xFF800000> : vector<64xf32>
    %2 = vector.multi_reduction <maximumf>, %0, %cst [1] : vector<64x10xf32> to vector<64xf32>
    %3 = vector.shape_cast %2 : vector<64xf32> to vector<64x1xf32>
    %4 = vector.broadcast %3 : vector<64x1xf32> to vector<64x10xf32>
    %5 = arith.subf %0, %4 : vector<64x10xf32>
    %6 = math.exp %5 : vector<64x10xf32>
    %cst_3 = arith.constant dense<0.000000e+00> : vector<64xf32>
    %7 = vector.multi_reduction <add>, %6, %cst_3 [1] : vector<64x10xf32> to vector<64xf32>
    %8 = vector.shape_cast %7 : vector<64xf32> to vector<64x1xf32>
    %9 = math.log %8 : vector<64x1xf32>
    %10 = vector.broadcast %9 : vector<64x1xf32> to vector<64x10xf32>
    %11 = arith.subf %5, %10 : vector<64x10xf32>
    %cst_4 = arith.constant 1.000000e+00 : f32
    %12 = vector.broadcast %cst_4 : f32 to vector<64x1xf32>
    %13 = arith.divf %12, %8 : vector<64x1xf32>
    %14 = vector.broadcast %13 : vector<64x1xf32> to vector<64x10xf32>
    %15 = arith.mulf %6, %14 : vector<64x10xf32>
    %cst_5 = arith.constant 1.000000e+00 : f32
    %16 = vector.broadcast %cst_5 : f32 to vector<64x10xf32>
    %17 = arith.subf %16, %15 : vector<64x10xf32>
    %18 = arith.mulf %17, %17 : vector<64x10xf32>
    %19 = arith.mulf %18, %11 : vector<64x10xf32>
    %cst_6 = arith.constant 0.000000e+00 : f32
    %20 = vector.broadcast %cst_6 : f32 to vector<64x10xf32>
    %21 = arith.subf %20, %19 : vector<64x10xf32>
    %22 = tpu.iota {dimensions = array<i32: 1>} : vector<64x10xi32>
    %23 = vector.broadcast %1 : vector<64x1xi32> to vector<64x10xi32>
    %24 = arith.cmpi eq, %22, %23 : vector<64x10xi32>
    %cst_7 = arith.constant 0.000000e+00 : f32
    %25 = vector.broadcast %cst_7 : f32 to vector<64x10xf32>
    %26 = arith.select %24, %21, %25 : vector<64x10xi1>, vector<64x10xf32>
    %27 = vector.extract_strided_slice %26 {offsets = [0, 0], sizes = [8, 10], strides = [1, 1]} : vector<64x10xf32> to vector<8x10xf32>
    %28 = vector.extract_strided_slice %26 {offsets = [8, 0], sizes = [8, 10], strides = [1, 1]} : vector<64x10xf32> to vector<8x10xf32>
    %29 = vector.extract_strided_slice %26 {offsets = [16, 0], sizes = [8, 10], strides = [1, 1]} : vector<64x10xf32> to vector<8x10xf32>
    %30 = vector.extract_strided_slice %26 {offsets = [24, 0], sizes = [8, 10], strides = [1, 1]} : vector<64x10xf32> to vector<8x10xf32>
    %31 = vector.extract_strided_slice %26 {offsets = [32, 0], sizes = [8, 10], strides = [1, 1]} : vector<64x10xf32> to vector<8x10xf32>
    %32 = vector.extract_strided_slice %26 {offsets = [40, 0], sizes = [8, 10], strides = [1, 1]} : vector<64x10xf32> to vector<8x10xf32>
    %33 = vector.extract_strided_slice %26 {offsets = [48, 0], sizes = [8, 10], strides = [1, 1]} : vector<64x10xf32> to vector<8x10xf32>
    %34 = vector.extract_strided_slice %26 {offsets = [56, 0], sizes = [8, 10], strides = [1, 1]} : vector<64x10xf32> to vector<8x10xf32>
    %35 = arith.addf %27, %28 : vector<8x10xf32>
    %36 = arith.addf %29, %30 : vector<8x10xf32>
    %37 = arith.addf %31, %32 : vector<8x10xf32>
    %38 = arith.addf %33, %34 : vector<8x10xf32>
    %39 = arith.addf %35, %36 : vector<8x10xf32>
    %40 = arith.addf %37, %38 : vector<8x10xf32>
    %41 = arith.addf %39, %40 : vector<8x10xf32>
    %c0_8 = arith.constant 0 : index
    %c0_9 = arith.constant 0 : index
    %c0_10 = arith.constant 0 : index
    %42 = vector.load %arg3[%c0_8, %c0_9, %c0_10] : memref<1x8x10xf32, #tpu.memory_space<vmem>>, vector<1x8x10xf32>
    %43 = vector.shape_cast %42 : vector<1x8x10xf32> to vector<8x10xf32>
    %44 = vector.shape_cast %41 : vector<8x10xf32> to vector<1x8x10xf32>
    tpu.vector_store %arg3[%c0_8, %c0_9, %c0_10], %44 {strides = array<i32>} : memref<1x8x10xf32, #tpu.memory_space<vmem>>, vector<1x8x10xf32>,
    return
  }
  func.func @transform_0(%arg0: i32) -> (i32, i32) {
    %c0_i32 = arith.constant 0 : i32
    %c0_i32_0 = arith.constant 0 : i32
    return %arg0, %c0_i32 : i32, i32
  }
  func.func @transform_1(%arg0: i32) -> (i32, i32) {
    %c0_i32 = arith.constant 0 : i32
    %c0_i32_0 = arith.constant 0 : i32
    return %arg0, %c0_i32 : i32, i32
  }
  func.func @transform_2(%arg0: i32) -> (i32, i32, i32) {
    %c0_i32 = arith.constant 0 : i32
    %c0_i32_0 = arith.constant 0 : i32
    %c0_i32_1 = arith.constant 0 : i32
    return %arg0, %c0_i32, %c0_i32_0 : i32, i32, i32
  }
}

</mosaic_0001>

<llo_original>
// kernel: tpu_custom_call.1
$region0: #{tpu_custom_call.1}
  #allocation0 [shape = 'u32[]', space=smem, size = 0x4, offset = 0x4, fixed_abs, tag = 'smem constant byte address 0x4 - core index']
  #allocation1 [shape = 'u32[144,128]{1,0:T(1,128)}', space=vmem, size = 0x12000, scoped, tag = 'internal scratch']
  %s0 = inlined_call_operand.vmem [shape: f32[64,10], index: 0, kind: input, shape index: {}]
  %s1 = inlined_call_operand.vmem [shape: s32[64,1], index: 1, kind: input, shape index: {}]
  %s2 = inlined_call_operand.hbm [shape: f32[1,8,10], index: 2, kind: output, shape index: {}]
  %s3 = sld [smem:[#allocation0]]
  $region18: #{tpu_custom_call.1} parent=0
    _
  %s5 = ssub.s32 1, %s3
  %s6 = scalar_select 0, %s5, %s3
  $region1: #{tpu_custom_call.1} parent=0
    #allocation2 [shape = 'u8[4096]{0}', space=vmem, size = 0x1000, scoped, tag = 'output window, operand 0, single buffered']
    #allocation3 [shape = 's32[1]{0}', space=sflag, size = 0x4, scoped, tag = 'scoped memory for tpu_custom_call.1']
    %7 = vsyncpa [#allocation3], 0
    // Predicated region
    $region2: #{tpu_custom_call.1} parent=1 // pred_check
      _
    $region3: #{tpu_custom_call.1} parent=1 // pred_check_branch
      %9 = sbr.rel (0) target = $region5
    $region4: #{tpu_custom_call.1} parent=1 // pred_region
      _
    $region5: #{tpu_custom_call.1} parent=1 // pred_fallthru
      _
    // Predicated region
    $region6: #{tpu_custom_call.1} parent=1 // pred_check
      _
    $region7: #{tpu_custom_call.1} parent=1 // pred_check_branch
      %11 = sbr.rel (0) target = $region9
    $region8: #{tpu_custom_call.1} parent=1 // pred_region
      _
    $region9: #{tpu_custom_call.1} parent=1 // pred_fallthru
      _
    %v12 = vld [vmem:[%s0] sm:$0xff]
    %v13 = vld [vmem:[%s0 + $0x8] sm:$0xff]
    %v14 = vld [vmem:[%s0 + $0x10] sm:$0xff]
    %v15 = vld [vmem:[%s0 + $0x18] sm:$0xff]
    %v16 = vld [vmem:[%s0 + $0x20] sm:$0xff]
    %v17 = vld [vmem:[%s0 + $0x28] sm:$0xff]
    %v18 = vld [vmem:[%s0 + $0x30] sm:$0xff]
    %v19 = vld [vmem:[%s0 + $0x38] sm:$0xff]
    %v20 = vld [vmem:[%s1] sm:$0xff]
    %v21 = vld [vmem:[%s1 + $0x8] sm:$0xff]
    %v22 = vld [vmem:[%s1 + $0x10] sm:$0xff]
    %v23 = vld [vmem:[%s1 + $0x18] sm:$0xff]
    %v24 = vld [vmem:[%s1 + $0x20] sm:$0xff]
    %v25 = vld [vmem:[%s1 + $0x28] sm:$0xff]
    %v26 = vld [vmem:[%s1 + $0x30] sm:$0xff]
    %v27 = vld [vmem:[%s1 + $0x38] sm:$0xff]
    %vm28 = vcmask 80896
    %v29 = vsel %vm28, %v12, -inf
    %30 = vmax.xlane.f32.xlu0 %v29
    %v31 = vpop.xlane.xlu0 %30
    %v32 = vsel %vm28, %v13, -inf
    %33 = vmax.xlane.f32.xlu0 %v32
    %v34 = vpop.xlane.xlu0 %33
    %v35 = vsel %vm28, %v14, -inf
    %36 = vmax.xlane.f32.xlu0 %v35
    %v37 = vpop.xlane.xlu0 %36
    %v38 = vsel %vm28, %v15, -inf
    %39 = vmax.xlane.f32.xlu0 %v38
    %v40 = vpop.xlane.xlu0 %39
    %v41 = vsel %vm28, %v16, -inf
    %42 = vmax.xlane.f32.xlu0 %v41
    %v43 = vpop.xlane.xlu0 %42
    %v44 = vsel %vm28, %v17, -inf
    %45 = vmax.xlane.f32.xlu0 %v44
    %v46 = vpop.xlane.xlu0 %45
    %v47 = vsel %vm28, %v18, -inf
    %48 = vmax.xlane.f32.xlu0 %v47
    %v49 = vpop.xlane.xlu0 %48
    %v50 = vsel %vm28, %v19, -inf
    %51 = vmax.xlane.f32.xlu0 %v50
    %v52 = vpop.xlane.xlu0 %51
    %v53 = vsub.f32 %v12, %v31
    %v54 = vsub.f32 %v13, %v34
    %v55 = vsub.f32 %v14, %v37
    %v56 = vsub.f32 %v15, %v40
    %v57 = vsub.f32 %v16, %v43
    %v58 = vsub.f32 %v17, %v46
    %v59 = vsub.f32 %v18, %v49
    %v60 = vsub.f32 %v19, %v52
    %v61 = vmul.f32 %v53, 1.442695
    %v62 = vpow.pop %v61
    %v63 = vmul.f32 %v54, 1.442695
    %v64 = vpow.pop %v63
    %v65 = vmul.f32 %v55, 1.442695
    %v66 = vpow.pop %v65
    %v67 = vmul.f32 %v56, 1.442695
    %v68 = vpow.pop %v67
    %v69 = vmul.f32 %v57, 1.442695
    %v70 = vpow.pop %v69
    %v71 = vmul.f32 %v58, 1.442695
    %v72 = vpow.pop %v71
    %v73 = vmul.f32 %v59, 1.442695
    %v74 = vpow.pop %v73
    %v75 = vmul.f32 %v60, 1.442695
    %v76 = vpow.pop %v75
    %v77 = vsel %vm28, %v62, 0.0
    %78 = vadd.xlane.f32.xlu0 %v77
    %v79 = vpop.xlane.xlu0 %78
    %v80 = vsel %vm28, %v64, 0.0
    %81 = vadd.xlane.f32.xlu0 %v80
    %v82 = vpop.xlane.xlu0 %81
    %v83 = vsel %vm28, %v66, 0.0
    %84 = vadd.xlane.f32.xlu0 %v83
    %v85 = vpop.xlane.xlu0 %84
    %v86 = vsel %vm28, %v68, 0.0
    %87 = vadd.xlane.f32.xlu0 %v86
    %v88 = vpop.xlane.xlu0 %87
    %v89 = vsel %vm28, %v70, 0.0
    %90 = vadd.xlane.f32.xlu0 %v89
    %v91 = vpop.xlane.xlu0 %90
    %v92 = vsel %vm28, %v72, 0.0
    %93 = vadd.xlane.f32.xlu0 %v92
    %v94 = vpop.xlane.xlu0 %93
    %v95 = vsel %vm28, %v74, 0.0
    %96 = vadd.xlane.f32.xlu0 %v95
    %v97 = vpop.xlane.xlu0 %96
    %v98 = vsel %vm28, %v76, 0.0
    %99 = vadd.xlane.f32.xlu0 %v98
    %v100 = vpop.xlane.xlu0 %99
    %v101 = vlog2.pop %v79
    %v102 = vmul.f32 %v101, 0.6931472
    %v103 = vlog2.pop %v82
    %v104 = vmul.f32 %v103, 0.6931472
    %v105 = vlog2.pop %v85
    %v106 = vmul.f32 %v105, 0.6931472
    %v107 = vlog2.pop %v88
    %v108 = vmul.f32 %v107, 0.6931472
    %v109 = vlog2.pop %v91
    %v110 = vmul.f32 %v109, 0.6931472
    %v111 = vlog2.pop %v94
    %v112 = vmul.f32 %v111, 0.6931472
    %v113 = vlog2.pop %v97
    %v114 = vmul.f32 %v113, 0.6931472
    %v115 = vlog2.pop %v100
    %v116 = vmul.f32 %v115, 0.6931472
    %v117 = vsub.f32 %v53, %v102
    %v118 = vsub.f32 %v54, %v104
    %v119 = vsub.f32 %v55, %v106
    %v120 = vsub.f32 %v56, %v108
    %v121 = vsub.f32 %v57, %v110
    %v122 = vsub.f32 %v58, %v112
    %v123 = vsub.f32 %v59, %v114
    %v124 = vsub.f32 %v60, %v116
    %v125 = vrcp.pop %v79
    %v126 = vmul.f32 1.0, %v125
    %v127 = vrcp.pop %v82
    %v128 = vmul.f32 1.0, %v127
    %v129 = vrcp.pop %v85
    %v130 = vmul.f32 1.0, %v129
    %v131 = vrcp.pop %v88
    %v132 = vmul.f32 1.0, %v131
    %v133 = vrcp.pop %v91
    %v134 = vmul.f32 1.0, %v133
    %v135 = vrcp.pop %v94
    %v136 = vmul.f32 1.0, %v135
    %v137 = vrcp.pop %v97
    %v138 = vmul.f32 1.0, %v137
    %v139 = vrcp.pop %v100
    %v140 = vmul.f32 1.0, %v139
    %v141 = vmul.f32 %v62, %v126
    %v142 = vmul.f32 %v64, %v128
    %v143 = vmul.f32 %v66, %v130
    %v144 = vmul.f32 %v68, %v132
    %v145 = vmul.f32 %v70, %v134
    %v146 = vmul.f32 %v72, %v136
    %v147 = vmul.f32 %v74, %v138
    %v148 = vmul.f32 %v76, %v140
    %v149 = vsub.f32 1.0, %v141
    %v150 = vsub.f32 1.0, %v142
    %v151 = vsub.f32 1.0, %v143
    %v152 = vsub.f32 1.0, %v144
    %v153 = vsub.f32 1.0, %v145
    %v154 = vsub.f32 1.0, %v146
    %v155 = vsub.f32 1.0, %v147
    %v156 = vsub.f32 1.0, %v148
    %v157 = vmul.f32 %v149, %v149
    %v158 = vmul.f32 %v150, %v150
    %v159 = vmul.f32 %v151, %v151
    %v160 = vmul.f32 %v152, %v152
    %v161 = vmul.f32 %v153, %v153
    %v162 = vmul.f32 %v154, %v154
    %v163 = vmul.f32 %v155, %v155
    %v164 = vmul.f32 %v156, %v156
    %v165 = vmul.f32 %v157, %v117
    %v166 = vmul.f32 %v158, %v118
    %v167 = vmul.f32 %v159, %v119
    %v168 = vmul.f32 %v160, %v120
    %v169 = vmul.f32 %v161, %v121
    %v170 = vmul.f32 %v162, %v122
    %v171 = vmul.f32 %v163, %v123
    %v172 = vmul.f32 %v164, %v124
    %v173 = vsub.f32 0.0, %v165
    %v174 = vsub.f32 0.0, %v166
    %v175 = vsub.f32 0.0, %v167
    %v176 = vsub.f32 0.0, %v168
    %v177 = vsub.f32 0.0, %v169
    %v178 = vsub.f32 0.0, %v170
    %v179 = vsub.f32 0.0, %v171
    %v180 = vsub.f32 0.0, %v172
    %v181 = vlaneseq
    %v182 = vand.u32 %v181, 127
    %183 = vset.pattern.permute.xlu0 0
    %184 = vperm.xlu0 %183, %v20
    %v185 = vpop.permute.xlu0 %184
    %186 = vset.pattern.permute.xlu0 0
    %187 = vperm.xlu0 %186, %v21
    %v188 = vpop.permute.xlu0 %187
    %189 = vset.pattern.permute.xlu0 0
    %190 = vperm.xlu0 %189, %v22
    %v191 = vpop.permute.xlu0 %190
    %192 = vset.pattern.permute.xlu0 0
    %193 = vperm.xlu0 %192, %v23
    %v194 = vpop.permute.xlu0 %193
    %195 = vset.pattern.permute.xlu0 0
    %196 = vperm.xlu0 %195, %v24
    %v197 = vpop.permute.xlu0 %196
    %198 = vset.pattern.permute.xlu0 0
    %199 = vperm.xlu0 %198, %v25
    %v200 = vpop.permute.xlu0 %199
    %201 = vset.pattern.permute.xlu0 0
    %202 = vperm.xlu0 %201, %v26
    %v203 = vpop.permute.xlu0 %202
    %204 = vset.pattern.permute.xlu0 0
    %205 = vperm.xlu0 %204, %v27
    %v206 = vpop.permute.xlu0 %205
    %vm207 = vcmp.eq.s32.totalorder %v182, %v185
    %vm208 = vcmp.eq.s32.totalorder %v182, %v188
    %vm209 = vcmp.eq.s32.totalorder %v182, %v191
    %vm210 = vcmp.eq.s32.totalorder %v182, %v194
    %vm211 = vcmp.eq.s32.totalorder %v182, %v197
    %vm212 = vcmp.eq.s32.totalorder %v182, %v200
    %vm213 = vcmp.eq.s32.totalorder %v182, %v203
    %vm214 = vcmp.eq.s32.totalorder %v182, %v206
    %v215 = vsel %vm207, %v173, 0.0
    %v216 = vsel %vm208, %v174, 0.0
    %v217 = vsel %vm209, %v175, 0.0
    %v218 = vsel %vm210, %v176, 0.0
    %v219 = vsel %vm211, %v177, 0.0
    %v220 = vsel %vm212, %v178, 0.0
    %v221 = vsel %vm213, %v179, 0.0
    %v222 = vsel %vm214, %v180, 0.0
    %v223 = vadd.f32 %v215, %v216
    %v224 = vadd.f32 %v217, %v218
    %v225 = vadd.f32 %v219, %v220
    %v226 = vadd.f32 %v221, %v222
    %v227 = vadd.f32 %v223, %v224
    %v228 = vadd.f32 %v225, %v226
    %v229 = vadd.f32 %v227, %v228
    %230 = vst.msk [vmem:[#allocation2] sm:$0xff] %vm28, %v229
    // Predicated region
    $region10: #{tpu_custom_call.1} parent=1 // pred_check
      _
    $region11: #{tpu_custom_call.1} parent=1 // pred_check_branch
      %232 = sbr.rel (0) target = $region13
    $region12: #{tpu_custom_call.1} parent=1 // pred_region
      %s234 = ssub.s32 128, 128
      %235 = vsyncadd [#allocation3], %s234
      %s237 = sshll.u32 [#allocation2], 4
      %s238 = int_to_ptr.vmem [resolvable:$true] %s237
      %240 = dma.vmem_to_hbm [thread:$0]  %s238, 128, %s2, [#allocation3]
    $region13: #{tpu_custom_call.1} parent=1 // pred_fallthru
      _
    // Predicated region
    $region14: #{tpu_custom_call.1} parent=1 // pred_check
      _
    $region15: #{tpu_custom_call.1} parent=1 // pred_check_branch
      %242 = sbr.rel (0) target = $region17
    $region16: #{tpu_custom_call.1} parent=1 // pred_region
      %243 = dma.done [#allocation3], 128
    $region17: #{tpu_custom_call.1} parent=1 // pred_fallthru
      _
    %244 = vsyncpa [#allocation3], 1

</llo_original>
